<compile_context>
chip_gen: v7x
topology: tpu7x:2x2x1
jax: 0.10.0
libtpu: 0.0.40
codegen_flags: <defaults>
</compile_context>

<pallas_src>
import jax
import jax.numpy as jnp
from jax.experimental import pallas as pl
from jax.experimental.pallas import tpu as pltpu

LANE = 128  # TPU lane width: pad fc3's output dim so the final store is unmasked.


def mlp_kernel(x_ref, w1_ref, b1_ref, w2_ref, b2_ref, w3_ref, b3_ref, o_ref):
    """Fused 3-layer MLP (fc1 -> ReLU -> fc2 -> ReLU -> fc3) for one batch tile.

    Matmul operands are bf16 (MXU), accumulation is f32; bias add and ReLU run
    on the f32 accumulator so no elementwise work happens in bf16.
    """
    x = x_ref[...]  # (TB, state_dim) bf16

    # fc1 + ReLU
    h1 = jnp.dot(x, w1_ref[...], preferred_element_type=jnp.float32) + b1_ref[...]
    h1 = jnp.maximum(h1, 0.0)

    # fc2 + ReLU
    h2 = jnp.dot(h1.astype(jnp.bfloat16), w2_ref[...],
                 preferred_element_type=jnp.float32) + b2_ref[...]
    h2 = jnp.maximum(h2, 0.0)

    # fc3 (no activation); output width is lane-padded -> unmasked store.
    out = jnp.dot(h2.astype(jnp.bfloat16), w3_ref[...],
                  preferred_element_type=jnp.float32) + b3_ref[...]
    o_ref[...] = out.astype(o_ref.dtype)


def net_forward(x, params, *, action_dim, tb=256):
    """x: (B, state_dim). params: output of prepare_params().

    Batch is tiled with a 1-D grid (double-buffered by BlockSpec); weights and
    biases use constant index_maps so they are staged into VMEM once and stay
    resident across batch tiles. The batch axis is "parallel" so v7x's two
    TensorCores split the tiles.

    Note (per perf review): at B=1-2 the cost is launch + weight staging, not
    compute -- amortize by batching several env states / both online+target
    networks into a single call at the DQN act()/train() call sites.
    """
    w1, b1 = params["w1"], params["b1"]
    w2, b2 = params["w2"], params["b2"]
    w3, b3 = params["w3"], params["b3"]

    B, state_dim = x.shape
    n_pad = w3.shape[1]          # lane-padded fc3 width (multiple of 128)
    tb = min(tb, B)              # don't overshoot tiny (inference) batches
    grid = (pl.cdiv(B, tb),)

    x = x.astype(jnp.bfloat16)   # halve x DMA; f32 accumulation in-kernel

    def pinned(arr):             # full-array block, same tile every grid step
        return pl.BlockSpec(arr.shape, lambda i: (0, 0))

    out = pl.pallas_call(
        mlp_kernel,
        out_shape=jax.ShapeDtypeStruct((B, n_pad), jnp.float32),
        grid=grid,
        in_specs=[
            pl.BlockSpec((tb, state_dim), lambda i: (i, 0)),  # x: batch-tiled
            pinned(w1), pinned(b1),
            pinned(w2), pinned(b2),
            pinned(w3), pinned(b3),
        ],
        out_specs=pl.BlockSpec((tb, n_pad), lambda i: (i, 0)),
        compiler_params=pltpu.CompilerParams(
            dimension_semantics=("parallel",),
        ),
    )(x, w1, b1, w2, b2, w3, b3)

    return out[:, :action_dim]   # drop fc3's lane padding


def prepare_params(params):
    """One-time (off hot-path) parameter prep:
    - weights in bf16 (halves the dominant weight DMA; MXU accumulates in f32),
    - biases in f32 with shape (1, out) for clean sublane broadcast,
    - fc3 weight/bias lane-padded to a multiple of 128 for an unmasked store.
    """
    w1 = params["w1"].astype(jnp.bfloat16)
    w2 = params["w2"].astype(jnp.bfloat16)
    b1 = params["b1"].reshape(1, -1).astype(jnp.float32)
    b2 = params["b2"].reshape(1, -1).astype(jnp.float32)
    w3 = params["w3"]
    b3 = params["b3"].reshape(1, -1)
    pad = (-w3.shape[1]) % LANE
    if pad:
        w3 = jnp.pad(w3, ((0, 0), (0, pad)))
        b3 = jnp.pad(b3, ((0, 0), (0, pad)))
    return {
        "w1": w1, "b1": b1,
        "w2": w2, "b2": b2,
        "w3": w3.astype(jnp.bfloat16), "b3": b3.astype(jnp.float32),
    }


def init_params(key, state_dim=8, action_dim=4, hidden_dim=(256, 256)):
    """Deterministic init mirroring nn.Linear's U(-1/sqrt(fan_in), 1/sqrt(fan_in)).

    Weights stored as (in_features, out_features) so the kernel computes
    y = x @ W + b (equivalent to torch's x @ W.T + b with (out, in) layout).
    """
    dims = [state_dim, hidden_dim[0], hidden_dim[1], action_dim]
    params = {}
    for i in range(3):
        fan_in, fan_out = dims[i], dims[i + 1]
        key, kw, kb = jax.random.split(key, 3)
        bound = 1.0 / jnp.sqrt(jnp.float32(fan_in))
        params[f"w{i+1}"] = jax.random.uniform(
            kw, (fan_in, fan_out), jnp.float32, -bound, bound
        )
        params[f"b{i+1}"] = jax.random.uniform(
            kb, (1, fan_out), jnp.float32, -bound, bound
        )
    return params


if __name__ == "__main__":
    key = jax.random.PRNGKey(0)
    key, kx, kx2 = jax.random.split(key, 3)

    B, STATE_DIM, ACTION_DIM = 2, 8, 4
    raw = init_params(key, state_dim=STATE_DIM, action_dim=ACTION_DIM)
    params = prepare_params(raw)

    fwd = jax.jit(net_forward, static_argnames=("action_dim", "tb"))

    def ref_forward(xv, rp):
        # Pure-JAX reference mirroring the kernel's bf16 operand quantization
        # (matmul accumulation stays f32, as on the MXU).
        q = lambda a: a.astype(jnp.bfloat16).astype(jnp.float32)
        h1 = jnp.maximum(q(xv) @ q(rp["w1"]) + rp["b1"], 0.0)
        h2 = jnp.maximum(q(h1) @ q(rp["w2"]) + rp["b2"], 0.0)
        return q(h2) @ q(rp["w3"]) + rp["b3"]

    # Inference-sized batch (DQN act()): single tiny tile.
    x = jax.random.normal(kx, (B, STATE_DIM), jnp.float32)
    out = jax.block_until_ready(fwd(x, params, action_dim=ACTION_DIM))
    assert out.shape == (B, ACTION_DIM)
    assert jnp.allclose(out, ref_forward(x, raw), atol=2e-2, rtol=2e-2)

    # Training-sized batch: exercises the batch grid incl. a partial last tile.
    B2 = 300
    x2 = jax.random.normal(kx2, (B2, STATE_DIM), jnp.float32)
    out2 = jax.block_until_ready(fwd(x2, params, action_dim=ACTION_DIM, tb=128))
    assert out2.shape == (B2, ACTION_DIM)
    assert jnp.allclose(out2, ref_forward(x2, raw), atol=2e-2, rtol=2e-2)

    print("KERNEL_OK")
</pallas_src>

<mosaic_0001>
module attributes {stable_mosaic.version = 11 : i64} {
  func.func @mlp_kernel(%arg0: i32, %arg1: memref<2x8xbf16, #tpu.memory_space<vmem>>, %arg2: memref<8x256xbf16, #tpu.memory_space<vmem>>, %arg3: memref<1x256xf32, #tpu.memory_space<vmem>>, %arg4: memref<256x256xbf16, #tpu.memory_space<vmem>>, %arg5: memref<1x256xf32, #tpu.memory_space<vmem>>, %arg6: memref<256x128xbf16, #tpu.memory_space<vmem>>, %arg7: memref<1x128xf32, #tpu.memory_space<vmem>>, %arg8: memref<2x128xf32, #tpu.memory_space<vmem>>) attributes {dimension_semantics = [#tpu.dimension_semantics<parallel>], iteration_bounds = array<i64: 1>, scalar_prefetch = 0 : i64, scratch_operands = 0 : i64, tpu.core_type = #tpu.core_type<tc>, window_params = [{transform_indices = @transform_0, window_bounds = array<i64: 2, 8>}, {pipeline_mode = #tpu.pipeline_mode<synchronous>, transform_indices = @transform_1, window_bounds = array<i64: 8, 256>}, {pipeline_mode = #tpu.pipeline_mode<synchronous>, transform_indices = @transform_2, window_bounds = array<i64: 1, 256>}, {pipeline_mode = #tpu.pipeline_mode<synchronous>, transform_indices = @transform_3, window_bounds = array<i64: 256, 256>}, {pipeline_mode = #tpu.pipeline_mode<synchronous>, transform_indices = @transform_4, window_bounds = array<i64: 1, 256>}, {pipeline_mode = #tpu.pipeline_mode<synchronous>, transform_indices = @transform_5, window_bounds = array<i64: 256, 128>}, {pipeline_mode = #tpu.pipeline_mode<synchronous>, transform_indices = @transform_6, window_bounds = array<i64: 1, 128>}, {transform_indices = @transform_7, window_bounds = array<i64: 2, 128>}]} {
    %c0 = arith.constant 0 : index
    %c0_0 = arith.constant 0 : index
    %0 = vector.load %arg1[%c0, %c0_0] : memref<2x8xbf16, #tpu.memory_space<vmem>>, vector<2x8xbf16>
    %c0_1 = arith.constant 0 : index
    %c0_2 = arith.constant 0 : index
    %1 = vector.load %arg2[%c0_1, %c0_2] : memref<8x256xbf16, #tpu.memory_space<vmem>>, vector<8x256xbf16>
    %cst = arith.constant dense<0.000000e+00> : vector<2x256xf32>
    %2 = tpu.matmul %0, %1, %cst {dimension_numbers = #tpu.dot_dimension_numbers<[1], [0], [0], [1], [0, 0, 1, 1], [], []>} : vector<2x8xbf16>, vector<8x256xbf16>, vector<2x256xf32> -> vector<2x256xf32>
    %c0_3 = arith.constant 0 : index
    %c0_4 = arith.constant 0 : index
    %3 = vector.load %arg3[%c0_3, %c0_4] : memref<1x256xf32, #tpu.memory_space<vmem>>, vector<1x256xf32>
    %4 = vector.broadcast %3 : vector<1x256xf32> to vector<2x256xf32>
    %5 = arith.addf %2, %4 : vector<2x256xf32>
    %cst_5 = arith.constant 0.000000e+00 : f32
    %6 = vector.broadcast %cst_5 : f32 to vector<2x256xf32>
    %7 = arith.maximumf %5, %6 : vector<2x256xf32>
    %8 = arith.truncf %7 : vector<2x256xf32> to vector<2x256xbf16>
    %c0_6 = arith.constant 0 : index
    %c0_7 = arith.constant 0 : index
    %9 = vector.load %arg4[%c0_6, %c0_7] : memref<256x256xbf16, #tpu.memory_space<vmem>>, vector<256x256xbf16>
    %cst_8 = arith.constant dense<0.000000e+00> : vector<2x256xf32>
    %10 = tpu.matmul %8, %9, %cst_8 {dimension_numbers = #tpu.dot_dimension_numbers<[1], [0], [0], [1], [0, 0, 1, 1], [], []>} : vector<2x256xbf16>, vector<256x256xbf16>, vector<2x256xf32> -> vector<2x256xf32>
    %c0_9 = arith.constant 0 : index
    %c0_10 = arith.constant 0 : index
    %11 = vector.load %arg5[%c0_9, %c0_10] : memref<1x256xf32, #tpu.memory_space<vmem>>, vector<1x256xf32>
    %12 = vector.broadcast %11 : vector<1x256xf32> to vector<2x256xf32>
    %13 = arith.addf %10, %12 : vector<2x256xf32>
    %cst_11 = arith.constant 0.000000e+00 : f32
    %14 = vector.broadcast %cst_11 : f32 to vector<2x256xf32>
    %15 = arith.maximumf %13, %14 : vector<2x256xf32>
    %16 = arith.truncf %15 : vector<2x256xf32> to vector<2x256xbf16>
    %c0_12 = arith.constant 0 : index
    %c0_13 = arith.constant 0 : index
    %17 = vector.load %arg6[%c0_12, %c0_13] : memref<256x128xbf16, #tpu.memory_space<vmem>>, vector<256x128xbf16>
    %cst_14 = arith.constant dense<0.000000e+00> : vector<2x128xf32>
    %18 = tpu.matmul %16, %17, %cst_14 {dimension_numbers = #tpu.dot_dimension_numbers<[1], [0], [0], [1], [0, 0, 1, 1], [], []>} : vector<2x256xbf16>, vector<256x128xbf16>, vector<2x128xf32> -> vector<2x128xf32>
    %c0_15 = arith.constant 0 : index
    %c0_16 = arith.constant 0 : index
    %19 = vector.load %arg7[%c0_15, %c0_16] : memref<1x128xf32, #tpu.memory_space<vmem>>, vector<1x128xf32>
    %20 = vector.broadcast %19 : vector<1x128xf32> to vector<2x128xf32>
    %21 = arith.addf %18, %20 : vector<2x128xf32>
    %c0_17 = arith.constant 0 : index
    %c0_18 = arith.constant 0 : index
    %22 = vector.load %arg8[%c0_17, %c0_18] : memref<2x128xf32, #tpu.memory_space<vmem>>, vector<2x128xf32>
    tpu.vector_store %arg8[%c0_17, %c0_18], %21 {strides = array<i32>} : memref<2x128xf32, #tpu.memory_space<vmem>>, vector<2x128xf32>,
    return
  }
  func.func @transform_0(%arg0: i32) -> (i32, i32) {
    %c0_i32 = arith.constant 0 : i32
    %c0_i32_0 = arith.constant 0 : i32
    return %arg0, %c0_i32 : i32, i32
  }
  func.func @transform_1(%arg0: i32) -> (i32, i32) {
    %c0_i32 = arith.constant 0 : i32
    %c0_i32_0 = arith.constant 0 : i32
    %c0_i32_1 = arith.constant 0 : i32
    return %c0_i32, %c0_i32_0 : i32, i32
  }
  func.func @transform_2(%arg0: i32) -> (i32, i32) {
    %c0_i32 = arith.constant 0 : i32
    %c0_i32_0 = arith.constant 0 : i32
    %c0_i32_1 = arith.constant 0 : i32
    return %c0_i32, %c0_i32_0 : i32, i32
  }
  func.func @transform_3(%arg0: i32) -> (i32, i32) {
    %c0_i32 = arith.constant 0 : i32
    %c0_i32_0 = arith.constant 0 : i32
    %c0_i32_1 = arith.constant 0 : i32
    return %c0_i32, %c0_i32_0 : i32, i32
  }
  func.func @transform_4(%arg0: i32) -> (i32, i32) {
    %c0_i32 = arith.constant 0 : i32
    %c0_i32_0 = arith.constant 0 : i32
    %c0_i32_1 = arith.constant 0 : i32
    return %c0_i32, %c0_i32_0 : i32, i32
  }
  func.func @transform_5(%arg0: i32) -> (i32, i32) {
    %c0_i32 = arith.constant 0 : i32
    %c0_i32_0 = arith.constant 0 : i32
    %c0_i32_1 = arith.constant 0 : i32
    return %c0_i32, %c0_i32_0 : i32, i32
  }
  func.func @transform_6(%arg0: i32) -> (i32, i32) {
    %c0_i32 = arith.constant 0 : i32
    %c0_i32_0 = arith.constant 0 : i32
    %c0_i32_1 = arith.constant 0 : i32
    return %c0_i32, %c0_i32_0 : i32, i32
  }
  func.func @transform_7(%arg0: i32) -> (i32, i32) {
    %c0_i32 = arith.constant 0 : i32
    %c0_i32_0 = arith.constant 0 : i32
    return %arg0, %c0_i32 : i32, i32
  }
}

</mosaic_0001>

<llo_original>
// kernel: net_forward.1
$region0: #{net_forward.1}
  #allocation0 [shape = 'u32[]', space=smem, size = 0x4, offset = 0x4, fixed_abs, tag = 'smem constant byte address 0x4 - core index']
  #allocation1 [shape = 'u32[144,128]{1,0:T(1,128)}', space=vmem, size = 0x12000, scoped, tag = 'internal scratch']
  %s0 = inlined_call_operand.vmem [shape: bf16[2,8], index: 0, kind: input, shape index: {}]
  %s1 = inlined_call_operand.vmem [shape: bf16[8,256], index: 1, kind: input, shape index: {}]
  %s2 = inlined_call_operand.vmem [shape: f32[1,256], index: 2, kind: input, shape index: {}]
  %s3 = inlined_call_operand.hbm [shape: bf16[256,256], index: 3, kind: input, shape index: {}]
  %s4 = inlined_call_operand.vmem [shape: f32[1,256], index: 4, kind: input, shape index: {}]
  %s5 = inlined_call_operand.hbm [shape: bf16[256,128], index: 5, kind: input, shape index: {}]
  %s6 = inlined_call_operand.vmem [shape: f32[1,128], index: 6, kind: input, shape index: {}]
  %s7 = inlined_call_operand.hbm [shape: f32[2,128], index: 7, kind: output, shape index: {}]
  %s8 = sld [smem:[#allocation0]]
  $region46: #{net_forward.1} parent=0
    _
  %s10 = ssub.s32 1, %s8
  %s11 = scalar_select 0, %s10, %s8
  $region1: #{net_forward.1} parent=0
    #allocation2 [shape = 'u8[131072]{0}', space=vmem, size = 0x20000, scoped, tag = 'input window, operand 3, single buffered']
    #allocation3 [shape = 's32[1]{0}', space=sflag, size = 0x4, scoped, tag = 'scoped memory for net_forward.1']
    #allocation4 [shape = 's32[1]{0}', space=sflag, size = 0x4, scoped, tag = 'scoped memory for net_forward.1']
    #allocation5 [shape = 'u8[65536]{0}', space=vmem, size = 0x10000, scoped, tag = 'input window, operand 5, single buffered']
    #allocation6 [shape = 's32[1]{0}', space=sflag, size = 0x4, scoped, tag = 'scoped memory for net_forward.1']
    #allocation7 [shape = 'u8[1024]{0}', space=vmem, size = 0x400, scoped, tag = 'output window, operand 0, single buffered']
    %12 = vsyncpa [#allocation3], 0
    %13 = vsyncpa [#allocation6], 0
    %14 = vsyncpa [#allocation4], 0
    // Predicated region
    $region2: #{net_forward.1} parent=1 // pred_check
      _
    $region3: #{net_forward.1} parent=1 // pred_check_branch
      %16 = sbr.rel (0) target = $region5
    $region4: #{net_forward.1} parent=1 // pred_region
      _
    $region5: #{net_forward.1} parent=1 // pred_fallthru
      _
    // Predicated region
    $region6: #{net_forward.1} parent=1 // pred_check
      _
    $region7: #{net_forward.1} parent=1 // pred_check_branch
      %18 = sbr.rel (0) target = $region9
    $region8: #{net_forward.1} parent=1 // pred_region
      _
    $region9: #{net_forward.1} parent=1 // pred_fallthru
      _
    // Predicated region
    $region10: #{net_forward.1} parent=1 // pred_check
      _
    $region11: #{net_forward.1} parent=1 // pred_check_branch
      %20 = sbr.rel (0) target = $region13
    $region12: #{net_forward.1} parent=1 // pred_region
      _
    $region13: #{net_forward.1} parent=1 // pred_fallthru
      _
    // Predicated region
    $region14: #{net_forward.1} parent=1 // pred_check
      _
    $region15: #{net_forward.1} parent=1 // pred_check_branch
      %22 = sbr.rel (0) target = $region17
    $region16: #{net_forward.1} parent=1 // pred_region
      %s24 = ssub.s32 4096, 4096
      %25 = vsyncadd [#allocation3], %s24
      %s26 = sshll.u32 [#allocation2], 4
      %s27 = int_to_ptr.vmem [resolvable:$true] %s26
      %32 = dma.hbm_to_vmem [thread:$0]  %s3, 4096, %s27, [#allocation3], 128, 128, 8
    $region17: #{net_forward.1} parent=1 // pred_fallthru
      _
    // Predicated region
    $region18: #{net_forward.1} parent=1 // pred_check
      _
    $region19: #{net_forward.1} parent=1 // pred_check_branch
      %34 = sbr.rel (0) target = $region21
    $region20: #{net_forward.1} parent=1 // pred_region
      _
    $region21: #{net_forward.1} parent=1 // pred_fallthru
      _
    // Predicated region
    $region22: #{net_forward.1} parent=1 // pred_check
      _
    $region23: #{net_forward.1} parent=1 // pred_check_branch
      %36 = sbr.rel (0) target = $region25
    $region24: #{net_forward.1} parent=1 // pred_region
      %s38 = ssub.s32 2048, 2048
      %39 = vsyncadd [#allocation6], %s38
      %s40 = sshll.u32 [#allocation5], 4
      %s41 = int_to_ptr.vmem [resolvable:$true] %s40
      %46 = dma.hbm_to_vmem [thread:$0]  %s5, 2048, %s41, [#allocation6], 64, 64, 4
    $region25: #{net_forward.1} parent=1 // pred_fallthru
      _
    // Predicated region
    $region26: #{net_forward.1} parent=1 // pred_check
      _
    $region27: #{net_forward.1} parent=1 // pred_check_branch
      %48 = sbr.rel (0) target = $region29
    $region28: #{net_forward.1} parent=1 // pred_region
      _
    $region29: #{net_forward.1} parent=1 // pred_fallthru
      _
    // Predicated region
    $region30: #{net_forward.1} parent=1 // pred_check
      _
    $region31: #{net_forward.1} parent=1 // pred_check_branch
      %50 = sbr.rel (0) target = $region33
    $region32: #{net_forward.1} parent=1 // pred_region
      %51 = dma.done [#allocation3], 4096
    $region33: #{net_forward.1} parent=1 // pred_fallthru
      _
    // Predicated region
    $region34: #{net_forward.1} parent=1 // pred_check
      _
    $region35: #{net_forward.1} parent=1 // pred_check_branch
      %53 = sbr.rel (0) target = $region37
    $region36: #{net_forward.1} parent=1 // pred_region
      %54 = dma.done [#allocation6], 2048
    $region37: #{net_forward.1} parent=1 // pred_fallthru
      _
    %v56 = vld [vmem:[%s0] sm:$0x1]
    %v57 = vld [vmem:[%s1] sm:$0xff]
    %v58 = vld [vmem:[%s2] sm:$0x3]
    %v60 = vlaneseq
    %v61 = vshrl.u32 %v60, 7
    %v62 = vsub.s32 0, %v61
    %v63 = vrot.slane %v58, %v62
    %v64 = vlaneseq
    %v65 = vshrl.u32 %v64, 7
    %v66 = vsub.s32 1, %v65
    %v67 = vrot.slane %v58, %v66
    %v71 = vunpack.c.l.b16 %v57
    %v72 = vunpack.c.h.b16 %v57
    %v73 = vpack.c.b16 %v71, %v71
    %v74 = vpack.c.b16 %v72, %v72
    %vm75 = vcmask 64512
    %v77 = vsel %vm75, %v56, 0
    %vm79 = vcmask 1043456
    %v81 = vsel %vm79, %v73, 0
    %v84 = vsel %vm79, %v74, 0
    %86 = vmatprep.subr.bf16.mxu0 %v84
    %87 = vmatpush1.bf16.msra.mxu0 %v81
    %88 = vmatprep.subr.bf16.mxu0 0
    %89 = vmatpush1.bf16.msra.mxu0 0
    %90 = vmatprep.subr.bf16.mxu0 0
    %91 = vmatpush1.bf16.msra.mxu0 0
    %92 = vmatprep.subr.bf16.mxu0 0
    %93 = vmatpush1.bf16.msra.mxu0 0
    %94 = vmatprep.subr.bf16.mxu0 0
    %95 = vmatpush1.bf16.msra.mxu0 0
    %96 = vmatprep.subr.bf16.mxu0 0
    %97 = vmatpush1.bf16.msra.mxu0 0
    %98 = vmatprep.subr.bf16.mxu0 0
    %99 = vmatpush1.bf16.msra.mxu0 0
    %100 = vmatprep.subr.bf16.mxu0 0
    %101 = vmatpush1.bf16.msra.mxu0 0
    %102 = vmatprep.subr.bf16.mxu0 0
    %103 = vmatpush1.bf16.msra.mxu0 0
    %104 = vmatprep.subr.bf16.mxu0 0
    %105 = vmatpush1.bf16.msra.mxu0 0
    %106 = vmatprep.subr.bf16.mxu0 0
    %107 = vmatpush1.bf16.msra.mxu0 0
    %108 = vmatprep.subr.bf16.mxu0 0
    %109 = vmatpush1.bf16.msra.mxu0 0
    %110 = vmatprep.subr.bf16.mxu0 0
    %111 = vmatpush1.bf16.msra.mxu0 0
    %112 = vmatprep.subr.bf16.mxu0 0
    %113 = vmatpush1.bf16.msra.mxu0 0
    %114 = vmatprep.subr.bf16.mxu0 0
    %115 = vmatpush1.bf16.msra.mxu0 0
    %116 = vmatprep.subr.bf16.mxu0 0
    %117 = vmatpush1.bf16.msra.mxu0 0
    %118 = vmatprep.mubr.bf16.mxu0 0
    %119 = vmatmul.mubr.bf16.gmra.mrb[0].mxu0 %v77
    %v120 = vpop.f32.mrb[0].mxu0
    %v121 = vadd.f32 %v63, %v120
    %v122 = vpop.f32.mrb[0].mxu0
    %v123 = vadd.f32 %v67, %v122
    %v124 = vpop.f32.mrb[0].mxu0
    %v125 = vpop.f32.mrb[0].mxu0
    %126 = vdwg.mxu0
    %v127 = vmax.f32 %v121, 0.0
    %v128 = vmax.f32 %v123, 0.0
    %v129 = vpack.c.bf16 %v127, %v127
    %v130 = vpack.c.bf16 %v128, %v128
    %v131 = vld [vmem:[#allocation2] sm:$0xff]
    %v132 = vld [vmem:[#allocation2 + $0x8] sm:$0xff]
    %v133 = vld [vmem:[#allocation2 + $0x10] sm:$0xff]
    %v134 = vld [vmem:[#allocation2 + $0x18] sm:$0xff]
    %v135 = vld [vmem:[#allocation2 + $0x20] sm:$0xff]
    %v136 = vld [vmem:[#allocation2 + $0x28] sm:$0xff]
    %v137 = vld [vmem:[#allocation2 + $0x30] sm:$0xff]
    %v138 = vld [vmem:[#allocation2 + $0x38] sm:$0xff]
    %v139 = vld [vmem:[#allocation2 + $0x40] sm:$0xff]
    %v140 = vld [vmem:[#allocation2 + $0x48] sm:$0xff]
    %v141 = vld [vmem:[#allocation2 + $0x50] sm:$0xff]
    %v142 = vld [vmem:[#allocation2 + $0x58] sm:$0xff]
    %v143 = vld [vmem:[#allocation2 + $0x60] sm:$0xff]
    %v144 = vld [vmem:[#allocation2 + $0x68] sm:$0xff]
    %v145 = vld [vmem:[#allocation2 + $0x70] sm:$0xff]
    %v146 = vld [vmem:[#allocation2 + $0x78] sm:$0xff]
    %v147 = vld [vmem:[#allocation2 + $0x80] sm:$0xff]
    %v148 = vld [vmem:[#allocation2 + $0x88] sm:$0xff]
    %v149 = vld [vmem:[#allocation2 + $0x90] sm:$0xff]
    %v150 = vld [vmem:[#allocation2 + $0x98] sm:$0xff]
    %v151 = vld [vmem:[#allocation2 + $0xa0] sm:$0xff]
    %v152 = vld [vmem:[#allocation2 + $0xa8] sm:$0xff]
    %v153 = vld [vmem:[#allocation2 + $0xb0] sm:$0xff]
    %v154 = vld [vmem:[#allocation2 + $0xb8] sm:$0xff]
    %v155 = vld [vmem:[#allocation2 + $0xc0] sm:$0xff]
    %v156 = vld [vmem:[#allocation2 + $0xc8] sm:$0xff]
    %v157 = vld [vmem:[#allocation2 + $0xd0] sm:$0xff]
    %v158 = vld [vmem:[#allocation2 + $0xd8] sm:$0xff]
    %v159 = vld [vmem:[#allocation2 + $0xe0] sm:$0xff]
    %v160 = vld [vmem:[#allocation2 + $0xe8] sm:$0xff]
    %v161 = vld [vmem:[#allocation2 + $0xf0] sm:$0xff]
    %v162 = vld [vmem:[#allocation2 + $0xf8] sm:$0xff]
    %v163 = vld [vmem:[%s4] sm:$0x3]
    %v165 = vlaneseq
    %v166 = vshrl.u32 %v165, 7
    %v167 = vsub.s32 0, %v166
    %v168 = vrot.slane %v163, %v167
    %v169 = vlaneseq
    %v170 = vshrl.u32 %v169, 7
    %v171 = vsub.s32 1, %v170
    %v172 = vrot.slane %v163, %v171
    %v207 = vunpack.c.l.b16 %v131
    %v208 = vunpack.c.h.b16 %v131
    %v209 = vunpack.c.l.b16 %v132
    %v210 = vunpack.c.h.b16 %v132
    %v211 = vunpack.c.l.b16 %v133
    %v212 = vunpack.c.h.b16 %v133
    %v213 = vunpack.c.l.b16 %v134
    %v214 = vunpack.c.h.b16 %v134
    %v215 = vunpack.c.l.b16 %v135
    %v216 = vunpack.c.h.b16 %v135
    %v217 = vunpack.c.l.b16 %v136
    %v218 = vunpack.c.h.b16 %v136
    %v219 = vunpack.c.l.b16 %v137
    %v220 = vunpack.c.h.b16 %v137
    %v221 = vunpack.c.l.b16 %v138
    %v222 = vunpack.c.h.b16 %v138
    %v223 = vunpack.c.l.b16 %v139
    %v224 = vunpack.c.h.b16 %v139
    %v225 = vunpack.c.l.b16 %v140
    %v226 = vunpack.c.h.b16 %v140
    %v227 = vunpack.c.l.b16 %v141
    %v228 = vunpack.c.h.b16 %v141
    %v229 = vunpack.c.l.b16 %v142
    %v230 = vunpack.c.h.b16 %v142
    %v231 = vunpack.c.l.b16 %v143
    %v232 = vunpack.c.h.b16 %v143
    %v233 = vunpack.c.l.b16 %v144
    %v234 = vunpack.c.h.b16 %v144
    %v235 = vunpack.c.l.b16 %v145
    %v236 = vunpack.c.h.b16 %v145
    %v237 = vunpack.c.l.b16 %v146
    %v238 = vunpack.c.h.b16 %v146
    %v239 = vunpack.c.l.b16 %v147
    %v240 = vunpack.c.h.b16 %v147
    %v241 = vunpack.c.l.b16 %v148
    %v242 = vunpack.c.h.b16 %v148
    %v243 = vunpack.c.l.b16 %v149
    %v244 = vunpack.c.h.b16 %v149
    %v245 = vunpack.c.l.b16 %v150
    %v246 = vunpack.c.h.b16 %v150
    %v247 = vunpack.c.l.b16 %v151
    %v248 = vunpack.c.h.b16 %v151
    %v249 = vunpack.c.l.b16 %v152
    %v250 = vunpack.c.h.b16 %v152
    %v251 = vunpack.c.l.b16 %v153
    %v252 = vunpack.c.h.b16 %v153
    %v253 = vunpack.c.l.b16 %v154
    %v254 = vunpack.c.h.b16 %v154
    %v255 = vunpack.c.l.b16 %v155
    %v256 = vunpack.c.h.b16 %v155
    %v257 = vunpack.c.l.b16 %v156
    %v258 = vunpack.c.h.b16 %v156
    %v259 = vunpack.c.l.b16 %v157
    %v260 = vunpack.c.h.b16 %v157
    %v261 = vunpack.c.l.b16 %v158
    %v262 = vunpack.c.h.b16 %v158
    %v263 = vunpack.c.l.b16 %v159
    %v264 = vunpack.c.h.b16 %v159
    %v265 = vunpack.c.l.b16 %v160
    %v266 = vunpack.c.h.b16 %v160
    %v267 = vunpack.c.l.b16 %v161
    %v268 = vunpack.c.h.b16 %v161
    %v269 = vunpack.c.l.b16 %v162
    %v270 = vunpack.c.h.b16 %v162
    %v271 = vpack.c.b16 %v209, %v207
    %v272 = vpack.c.b16 %v210, %v208
    %v273 = vpack.c.b16 %v213, %v211
    %v274 = vpack.c.b16 %v214, %v212
    %v275 = vpack.c.b16 %v217, %v215
    %v276 = vpack.c.b16 %v218, %v216
    %v277 = vpack.c.b16 %v221, %v219
    %v278 = vpack.c.b16 %v222, %v220
    %v279 = vpack.c.b16 %v225, %v223
    %v280 = vpack.c.b16 %v226, %v224
    %v281 = vpack.c.b16 %v229, %v227
    %v282 = vpack.c.b16 %v230, %v228
    %v283 = vpack.c.b16 %v233, %v231
    %v284 = vpack.c.b16 %v234, %v232
    %v285 = vpack.c.b16 %v237, %v235
    %v286 = vpack.c.b16 %v238, %v236
    %v287 = vpack.c.b16 %v241, %v239
    %v288 = vpack.c.b16 %v242, %v240
    %v289 = vpack.c.b16 %v245, %v243
    %v290 = vpack.c.b16 %v246, %v244
    %v291 = vpack.c.b16 %v249, %v247
    %v292 = vpack.c.b16 %v250, %v248
    %v293 = vpack.c.b16 %v253, %v251
    %v294 = vpack.c.b16 %v254, %v252
    %v295 = vpack.c.b16 %v257, %v255
    %v296 = vpack.c.b16 %v258, %v256
    %v297 = vpack.c.b16 %v261, %v259
    %v298 = vpack.c.b16 %v262, %v260
    %v299 = vpack.c.b16 %v265, %v263
    %v300 = vpack.c.b16 %v266, %v264
    %v301 = vpack.c.b16 %v269, %v267
    %v302 = vpack.c.b16 %v270, %v268
    %335 = vmatprep.subr.bf16.mxu0 %v272
    %336 = vmatpush1.bf16.msra.mxu0 %v271
    %337 = vmatprep.subr.bf16.mxu0 %v274
    %338 = vmatpush1.bf16.msra.mxu0 %v273
    %339 = vmatprep.subr.bf16.mxu0 %v276
    %340 = vmatpush1.bf16.msra.mxu0 %v275
    %341 = vmatprep.subr.bf16.mxu0 %v278
    %342 = vmatpush1.bf16.msra.mxu0 %v277
    %343 = vmatprep.subr.bf16.mxu0 %v280
    %344 = vmatpush1.bf16.msra.mxu0 %v279
    %345 = vmatprep.subr.bf16.mxu0 %v282
    %346 = vmatpush1.bf16.msra.mxu0 %v281
    %347 = vmatprep.subr.bf16.mxu0 %v284
    %348 = vmatpush1.bf16.msra.mxu0 %v283
    %349 = vmatprep.subr.bf16.mxu0 %v286
    %350 = vmatpush1.bf16.msra.mxu0 %v285
    %351 = vmatprep.subr.bf16.mxu0 %v288
    %352 = vmatpush1.bf16.msra.mxu0 %v287
    %353 = vmatprep.subr.bf16.mxu0 %v290
    %354 = vmatpush1.bf16.msra.mxu0 %v289
    %355 = vmatprep.subr.bf16.mxu0 %v292
    %356 = vmatpush1.bf16.msra.mxu0 %v291
    %357 = vmatprep.subr.bf16.mxu0 %v294
    %358 = vmatpush1.bf16.msra.mxu0 %v293
    %359 = vmatprep.subr.bf16.mxu0 %v296
    %360 = vmatpush1.bf16.msra.mxu0 %v295
    %361 = vmatprep.subr.bf16.mxu0 %v298
    %362 = vmatpush1.bf16.msra.mxu0 %v297
    %363 = vmatprep.subr.bf16.mxu0 %v300
    %364 = vmatpush1.bf16.msra.mxu0 %v299
    %365 = vmatprep.subr.bf16.mxu0 %v302
    %366 = vmatpush1.bf16.msra.mxu0 %v301
    %367 = vmatprep.mubr.bf16.mxu0 %v130
    %368 = vmatmul.mubr.bf16.gmra.mrb[0].mxu0 %v129
    %v369 = vpop.f32.mrb[0].mxu0
    %v370 = vadd.f32 %v168, %v369
    %v371 = vpop.f32.mrb[0].mxu0
    %v372 = vadd.f32 %v172, %v371
    %v373 = vpop.f32.mrb[0].mxu0
    %v374 = vpop.f32.mrb[0].mxu0
    %375 = vdwg.mxu0
    %v376 = vmax.f32 %v370, 0.0
    %v377 = vmax.f32 %v372, 0.0
    %v378 = vpack.c.bf16 %v376, %v376
    %v379 = vpack.c.bf16 %v377, %v377
    %v380 = vld [vmem:[#allocation5] sm:$0xf]
    %v381 = vld [vmem:[#allocation5 + $0x4] sm:$0xf]
    %v382 = vld [vmem:[#allocation5 + $0x8] sm:$0xf]
    %v383 = vld [vmem:[#allocation5 + $0xc] sm:$0xf]
    %v384 = vld [vmem:[#allocation5 + $0x10] sm:$0xf]
    %v385 = vld [vmem:[#allocation5 + $0x14] sm:$0xf]
    %v386 = vld [vmem:[#allocation5 + $0x18] sm:$0xf]
    %v387 = vld [vmem:[#allocation5 + $0x1c] sm:$0xf]
    %v388 = vld [vmem:[#allocation5 + $0x20] sm:$0xf]
    %v389 = vld [vmem:[#allocation5 + $0x24] sm:$0xf]
    %v390 = vld [vmem:[#allocation5 + $0x28] sm:$0xf]
    %v391 = vld [vmem:[#allocation5 + $0x2c] sm:$0xf]
    %v392 = vld [vmem:[#allocation5 + $0x30] sm:$0xf]
    %v393 = vld [vmem:[#allocation5 + $0x34] sm:$0xf]
    %v394 = vld [vmem:[#allocation5 + $0x38] sm:$0xf]
    %v395 = vld [vmem:[#allocation5 + $0x3c] sm:$0xf]
    %v396 = vld [vmem:[#allocation5 + $0x40] sm:$0xf]
    %v397 = vld [vmem:[#allocation5 + $0x44] sm:$0xf]
    %v398 = vld [vmem:[#allocation5 + $0x48] sm:$0xf]
    %v399 = vld [vmem:[#allocation5 + $0x4c] sm:$0xf]
    %v400 = vld [vmem:[#allocation5 + $0x50] sm:$0xf]
    %v401 = vld [vmem:[#allocation5 + $0x54] sm:$0xf]
    %v402 = vld [vmem:[#allocation5 + $0x58] sm:$0xf]
    %v403 = vld [vmem:[#allocation5 + $0x5c] sm:$0xf]
    %v404 = vld [vmem:[#allocation5 + $0x60] sm:$0xf]
    %v405 = vld [vmem:[#allocation5 + $0x64] sm:$0xf]
    %v406 = vld [vmem:[#allocation5 + $0x68] sm:$0xf]
    %v407 = vld [vmem:[#allocation5 + $0x6c] sm:$0xf]
    %v408 = vld [vmem:[#allocation5 + $0x70] sm:$0xf]
    %v409 = vld [vmem:[#allocation5 + $0x74] sm:$0xf]
    %v410 = vld [vmem:[#allocation5 + $0x78] sm:$0xf]
    %v411 = vld [vmem:[#allocation5 + $0x7c] sm:$0xf]
    %v412 = vld [vmem:[%s6] sm:$0x1]
    %v414 = vlaneseq
    %v415 = vshrl.u32 %v414, 7
    %v416 = vsub.s32 0, %v415
    %v417 = vrot.slane %v412, %v416
    %v451 = vunpack.c.l.b16 %v380
    %v452 = vunpack.c.l.b16 %v381
    %v453 = vunpack.c.l.b16 %v382
    %v454 = vunpack.c.l.b16 %v383
    %v455 = vunpack.c.l.b16 %v384
    %v456 = vunpack.c.l.b16 %v385
    %v457 = vunpack.c.l.b16 %v386
    %v458 = vunpack.c.l.b16 %v387
    %v459 = vunpack.c.l.b16 %v388
    %v460 = vunpack.c.l.b16 %v389
    %v461 = vunpack.c.l.b16 %v390
    %v462 = vunpack.c.l.b16 %v391
    %v463 = vunpack.c.l.b16 %v392
    %v464 = vunpack.c.l.b16 %v393
    %v465 = vunpack.c.l.b16 %v394
    %v466 = vunpack.c.l.b16 %v395
    %v467 = vunpack.c.l.b16 %v396
    %v468 = vunpack.c.l.b16 %v397
    %v469 = vunpack.c.l.b16 %v398
    %v470 = vunpack.c.l.b16 %v399
    %v471 = vunpack.c.l.b16 %v400
    %v472 = vunpack.c.l.b16 %v401
    %v473 = vunpack.c.l.b16 %v402
    %v474 = vunpack.c.l.b16 %v403
    %v475 = vunpack.c.l.b16 %v404
    %v476 = vunpack.c.l.b16 %v405
    %v477 = vunpack.c.l.b16 %v406
    %v478 = vunpack.c.l.b16 %v407
    %v479 = vunpack.c.l.b16 %v408
    %v480 = vunpack.c.l.b16 %v409
    %v481 = vunpack.c.l.b16 %v410
    %v482 = vunpack.c.l.b16 %v411
    %v483 = vpack.c.b16 %v452, %v451
    %v484 = vpack.c.b16 %v454, %v453
    %v485 = vpack.c.b16 %v456, %v455
    %v486 = vpack.c.b16 %v458, %v457
    %v487 = vpack.c.b16 %v460, %v459
    %v488 = vpack.c.b16 %v462, %v461
    %v489 = vpack.c.b16 %v464, %v463
    %v490 = vpack.c.b16 %v466, %v465
    %v491 = vpack.c.b16 %v468, %v467
    %v492 = vpack.c.b16 %v470, %v469
    %v493 = vpack.c.b16 %v472, %v471
    %v494 = vpack.c.b16 %v474, %v473
    %v495 = vpack.c.b16 %v476, %v475
    %v496 = vpack.c.b16 %v478, %v477
    %v497 = vpack.c.b16 %v480, %v479
    %v498 = vpack.c.b16 %v482, %v481
    %515 = vmatprep.subr.bf16.mxu0 0
    %516 = vmatpush1.bf16.msra.mxu0 %v483
    %517 = vmatprep.subr.bf16.mxu0 0
    %518 = vmatpush1.bf16.msra.mxu0 %v484
    %519 = vmatprep.subr.bf16.mxu0 0
    %520 = vmatpush1.bf16.msra.mxu0 %v485
    %521 = vmatprep.subr.bf16.mxu0 0
    %522 = vmatpush1.bf16.msra.mxu0 %v486
    %523 = vmatprep.subr.bf16.mxu0 0
    %524 = vmatpush1.bf16.msra.mxu0 %v487
    %525 = vmatprep.subr.bf16.mxu0 0
    %526 = vmatpush1.bf16.msra.mxu0 %v488
    %527 = vmatprep.subr.bf16.mxu0 0
    %528 = vmatpush1.bf16.msra.mxu0 %v489
    %529 = vmatprep.subr.bf16.mxu0 0
    %530 = vmatpush1.bf16.msra.mxu0 %v490
    %531 = vmatprep.subr.bf16.mxu0 0
    %532 = vmatpush1.bf16.msra.mxu0 %v491
    %533 = vmatprep.subr.bf16.mxu0 0
    %534 = vmatpush1.bf16.msra.mxu0 %v492
    %535 = vmatprep.subr.bf16.mxu0 0
    %536 = vmatpush1.bf16.msra.mxu0 %v493
    %537 = vmatprep.subr.bf16.mxu0 0
    %538 = vmatpush1.bf16.msra.mxu0 %v494
    %539 = vmatprep.subr.bf16.mxu0 0
    %540 = vmatpush1.bf16.msra.mxu0 %v495
    %541 = vmatprep.subr.bf16.mxu0 0
    %542 = vmatpush1.bf16.msra.mxu0 %v496
    %543 = vmatprep.subr.bf16.mxu0 0
    %544 = vmatpush1.bf16.msra.mxu0 %v497
    %545 = vmatprep.subr.bf16.mxu0 0
    %546 = vmatpush1.bf16.msra.mxu0 %v498
    %547 = vmatprep.mubr.bf16.mxu0 %v379
    %548 = vmatmul.mubr.bf16.gmra.mrb[0].mxu0 %v378
    %v549 = vpop.f32.mrb[0].mxu0
    %v550 = vadd.f32 %v417, %v549
    %v551 = vpop.f32.mrb[0].mxu0
    %v552 = vpop.f32.mrb[0].mxu0
    %v553 = vpop.f32.mrb[0].mxu0
    %554 = vdwg.mxu0
    %555 = vst [vmem:[#allocation7] sm:$0x3] %v550
    // Predicated region
    $region38: #{net_forward.1} parent=1 // pred_check
      _
    $region39: #{net_forward.1} parent=1 // pred_check_branch
      %557 = sbr.rel (0) target = $region41
    $region40: #{net_forward.1} parent=1 // pred_region
      %s559 = ssub.s32 32, 32
      %560 = vsyncadd [#allocation4], %s559
      %s562 = sshll.u32 [#allocation7], 4
      %s563 = int_to_ptr.vmem [resolvable:$true] %s562
      %565 = dma.vmem_to_hbm [thread:$0]  %s563, 32, %s7, [#allocation4]
    $region41: #{net_forward.1} parent=1 // pred_fallthru
      _
    // Predicated region
    $region42: #{net_forward.1} parent=1 // pred_check
      _
    $region43: #{net_forward.1} parent=1 // pred_check_branch
      %567 = sbr.rel (0) target = $region45
    $region44: #{net_forward.1} parent=1 // pred_region
      %568 = dma.done [#allocation4], 32
    $region45: #{net_forward.1} parent=1 // pred_fallthru
      _
    %569 = vsyncpa [#allocation3], 1
    %570 = vsyncpa [#allocation6], 1
    %571 = vsyncpa [#allocation4], 1

</llo_original>
